<compile_context>
chip_gen: v7x
topology: tpu7x:2x2x1
jax: 0.10.0
libtpu: 0.0.40
codegen_flags: <defaults>
</compile_context>

<pallas_src>
import functools

import jax
import jax.numpy as jnp
from jax.experimental import pallas as pl
from jax.experimental.pallas import tpu as pltpu


_BLOCK_BUDGET_BYTES = 6 * 1024 * 1024   # per pooled block (input OR output)
_VMEM_LIMIT_BYTES = 48 << 20            # < v7x's 64 MiB physical; well under v5e/v6e's 128 MiB


def _sublane_align(dtype) -> int:
    """Packed-sublane granularity for the second-to-last (batch) axis."""
    itemsize = jnp.dtype(dtype).itemsize
    return {4: 8, 2: 16, 1: 32}.get(itemsize, 8)


def _tile(dim, cap, align):
    """Tile for one axis, never exceeding `cap`.

    Full extent if dim <= cap (always layout-legal). Otherwise the largest multiple
    of `align` that is <= cap; a cdiv grid handles any partial final block.
    """
    if dim <= cap:
        return dim
    return max(align, (cap // align) * align)


def _rotation_kernel(pooled_ref, cooldown_ref, out_ref, *, neg_inv_tau):
    # suppression over a [1, tile_p] row: one VPU mul (precomputed -1/tau, no vector
    # divide) feeding the EUP exp. Recomputed per grid step -- it rides the otherwise
    # idle EUP slot and is hidden under the DMA stream; in exchange no scratch / no
    # pl.when, so both grid axes stay "parallel" (megacore-shardable).
    supp = 1.0 - jnp.exp(cooldown_ref[...] * neg_inv_tau)            # f32 [1, tile_p]
    # Multiply in the pooled dtype (native bf16 on v6e/v7x; f32 path identical to ref).
    out_ref[...] = pooled_ref[...] * supp.astype(out_ref.dtype)


def adaptive_prototype_rotation_forward(
    pooled,            # [B, P] activations
    class_weights,     # unused by forward (kept for API parity)
    cooldown_timers,   # [P] float buffer
    *,
    tau=5.0,
    enabled=True,
    training=True,
    donate_pooled=False,
):
    del class_weights  # forward() never touches class_weights
    if not enabled or not training:
        return pooled

    B, P = pooled.shape
    itemsize = jnp.dtype(pooled.dtype).itemsize
    max_block_elems = max(8 * 128, _BLOCK_BUDGET_BYTES // itemsize)  # bytes-based, dtype-aware
    b_align = _sublane_align(pooled.dtype)

    # Lane (prototype) axis as wide as the budget allows while leaving room for at
    # least one full-occupancy sublane group of batch rows; then size the batch tile.
    lane_cap = max(128, (max_block_elems // b_align) // 128 * 128)
    tile_p = _tile(P, lane_cap, 128)
    row_cap = max(b_align, max_block_elems // tile_p)
    tile_b = _tile(B, row_cap, b_align)

    # cdiv grid: partial final blocks (if any) are padded on read / masked on write,
    # so the per-block VMEM footprint never exceeds the budget.
    grid = (pl.cdiv(P, tile_p), pl.cdiv(B, tile_b))  # (1, 1) at small shapes

    cooldown_2d = cooldown_timers.reshape(1, P).astype(jnp.float32)
    kernel = functools.partial(_rotation_kernel, neg_inv_tau=-1.0 / float(tau))

    return pl.pallas_call(
        kernel,
        out_shape=jax.ShapeDtypeStruct((B, P), pooled.dtype),
        grid_spec=pltpu.PrefetchScalarGridSpec(
            num_scalar_prefetch=0,
            grid=grid,
            in_specs=[
                pl.BlockSpec((tile_b, tile_p), lambda p, b: (b, p)),
                pl.BlockSpec((1, tile_p), lambda p, b: (0, p)),
            ],
            out_specs=pl.BlockSpec((tile_b, tile_p), lambda p, b: (b, p)),
        ),
        compiler_params=pltpu.CompilerParams(
            # Both axes independent -> megacore can shard the batch axis on v7x even
            # when tile_p == P (the common case).
            dimension_semantics=("parallel", "parallel"),
            vmem_limit_bytes=_VMEM_LIMIT_BYTES,
        ),
        input_output_aliases=({0: 0} if donate_pooled else {}),
    )(pooled, cooldown_2d)


def _reference_forward(pooled, cooldown_timers, tau):
    supp = 1.0 - jnp.exp(-cooldown_timers.astype(jnp.float32) / tau)
    return (pooled.astype(jnp.float32) * supp[None, :]).astype(pooled.dtype)


if __name__ == "__main__":
    # Small, deterministic shapes consistent with the module:
    #   batch=8, num_prototypes=256, num_classes=10
    batch = 8
    num_prototypes = 256
    num_classes = 10
    tau = 5.0

    key = jax.random.PRNGKey(0)
    k_pooled, k_cool, k_w = jax.random.split(key, 3)

    pooled = jax.random.uniform(k_pooled, (batch, num_prototypes), dtype=jnp.float32)
    # Deterministic "buffer state": some prototypes recently used (nonzero timers).
    cooldown_timers = jax.random.uniform(
        k_cool, (num_prototypes,), dtype=jnp.float32, minval=0.0, maxval=10.0
    )
    # class_weights buffer as in __init__ shape convention [num_classes, num_prototypes]
    class_weights = jax.random.normal(
        k_w, (num_classes, num_prototypes), dtype=jnp.float32
    )

    out = adaptive_prototype_rotation_forward(
        pooled, class_weights, cooldown_timers, tau=tau, enabled=True, training=True
    )
    out = jax.block_until_ready(out)

    ref = _reference_forward(pooled, cooldown_timers, tau)
    assert out.shape == pooled.shape and out.dtype == pooled.dtype
    assert jnp.allclose(out, ref, atol=1e-6, rtol=1e-6)

    # eval / disabled path is a passthrough (no kernel), same as the PyTorch module
    out_eval = adaptive_prototype_rotation_forward(
        pooled, class_weights, cooldown_timers, tau=tau, enabled=True, training=False
    )
    assert out_eval is pooled

    # TODO(synk): update_timers() / get_most_influential_prototypes() /
    # visualize_prototype_status() are stateful or host-side utilities outside
    # forward() and are not kernelized here.
    print("KERNEL_OK")
</pallas_src>

<mosaic_0001>
module attributes {stable_mosaic.version = 11 : i64} {
  func.func @_rotation_kernel(%arg0: i32, %arg1: i32, %arg2: memref<8x256xf32, #tpu.memory_space<vmem>>, %arg3: memref<1x256xf32, #tpu.memory_space<vmem>>, %arg4: memref<8x256xf32, #tpu.memory_space<vmem>>) attributes {dimension_semantics = [#tpu.dimension_semantics<parallel>, #tpu.dimension_semantics<parallel>], iteration_bounds = array<i64: 1, 1>, scalar_prefetch = 0 : i64, scratch_operands = 0 : i64, tpu.core_type = #tpu.core_type<tc>, window_params = [{transform_indices = @transform_0, window_bounds = array<i64: 8, 256>}, {transform_indices = @transform_1, window_bounds = array<i64: 1, 256>}, {transform_indices = @transform_2, window_bounds = array<i64: 8, 256>}]} {
    %c0 = arith.constant 0 : index
    %c0_0 = arith.constant 0 : index
    %0 = vector.load %arg3[%c0, %c0_0] : memref<1x256xf32, #tpu.memory_space<vmem>>, vector<1x256xf32>
    %cst = arith.constant -2.000000e-01 : f32
    %1 = vector.broadcast %cst : f32 to vector<1x256xf32>
    %2 = arith.mulf %0, %1 : vector<1x256xf32>
    %3 = math.exp %2 : vector<1x256xf32>
    %cst_1 = arith.constant 1.000000e+00 : f32
    %4 = vector.broadcast %cst_1 : f32 to vector<1x256xf32>
    %5 = arith.subf %4, %3 : vector<1x256xf32>
    %c0_2 = arith.constant 0 : index
    %c0_3 = arith.constant 0 : index
    %6 = vector.load %arg2[%c0_2, %c0_3] : memref<8x256xf32, #tpu.memory_space<vmem>>, vector<8x256xf32>
    %7 = vector.broadcast %5 : vector<1x256xf32> to vector<8x256xf32>
    %8 = arith.mulf %6, %7 : vector<8x256xf32>
    %c0_4 = arith.constant 0 : index
    %c0_5 = arith.constant 0 : index
    %9 = vector.load %arg4[%c0_4, %c0_5] : memref<8x256xf32, #tpu.memory_space<vmem>>, vector<8x256xf32>
    tpu.vector_store %arg4[%c0_4, %c0_5], %8 {strides = array<i32>} : memref<8x256xf32, #tpu.memory_space<vmem>>, vector<8x256xf32>,
    return
  }
  func.func @transform_0(%arg0: i32, %arg1: i32) -> (i32, i32) {
    %c0_i32 = arith.constant 0 : i32
    return %arg1, %arg0 : i32, i32
  }
  func.func @transform_1(%arg0: i32, %arg1: i32) -> (i32, i32) {
    %c0_i32 = arith.constant 0 : i32
    %c0_i32_0 = arith.constant 0 : i32
    return %c0_i32, %arg0 : i32, i32
  }
  func.func @transform_2(%arg0: i32, %arg1: i32) -> (i32, i32) {
    %c0_i32 = arith.constant 0 : i32
    return %arg1, %arg0 : i32, i32
  }
}

</mosaic_0001>

<llo_original>
// kernel: tpu_custom_call.1
$region0: #{tpu_custom_call.1}
  #allocation0 [shape = 'u32[]', space=smem, size = 0x4, offset = 0x4, fixed_abs, tag = 'smem constant byte address 0x4 - core index']
  #allocation1 [shape = 'u32[144,128]{1,0:T(1,128)}', space=vmem, size = 0x12000, scoped, tag = 'internal scratch']
  %s0 = inlined_call_operand.hbm [shape: f32[8,256], index: 0, kind: input, shape index: {}]
  %s1 = inlined_call_operand.vmem [shape: f32[1,256], index: 1, kind: input, shape index: {}]
  %s2 = inlined_call_operand.hbm [shape: f32[8,256], index: 2, kind: output, shape index: {}]
  %s3 = sld [smem:[#allocation0]]
  $region22: #{tpu_custom_call.1} parent=0
    _
  %s5 = ssub.s32 1, %s3
  %s6 = scalar_select 0, %s5, %s3
  $region1: #{tpu_custom_call.1} parent=0
    #allocation2 [shape = 'u8[8192]{0}', space=vmem, size = 0x2000, scoped, tag = 'input window, operand 0, single buffered']
    #allocation3 [shape = 's32[1]{0}', space=sflag, size = 0x4, scoped, tag = 'scoped memory for tpu_custom_call.1']
    #allocation4 [shape = 's32[1]{0}', space=sflag, size = 0x4, scoped, tag = 'scoped memory for tpu_custom_call.1']
    #allocation5 [shape = 'u8[8192]{0}', space=vmem, size = 0x2000, scoped, tag = 'output window, operand 0, single buffered']
    %7 = vsyncpa [#allocation3], 0
    %8 = vsyncpa [#allocation4], 0
    // Predicated region
    $region2: #{tpu_custom_call.1} parent=1 // pred_check
      _
    $region3: #{tpu_custom_call.1} parent=1 // pred_check_branch
      %10 = sbr.rel (0) target = $region5
    $region4: #{tpu_custom_call.1} parent=1 // pred_region
      %s12 = ssub.s32 256, 256
      %13 = vsyncadd [#allocation3], %s12
      %s15 = sshll.u32 [#allocation2], 4
      %s16 = int_to_ptr.vmem [resolvable:$true] %s15
      %18 = dma.hbm_to_vmem [thread:$0]  %s0, 256, %s16, [#allocation3]
    $region5: #{tpu_custom_call.1} parent=1 // pred_fallthru
      _
    // Predicated region
    $region6: #{tpu_custom_call.1} parent=1 // pred_check
      _
    $region7: #{tpu_custom_call.1} parent=1 // pred_check_branch
      %20 = sbr.rel (0) target = $region9
    $region8: #{tpu_custom_call.1} parent=1 // pred_region
      _
    $region9: #{tpu_custom_call.1} parent=1 // pred_fallthru
      _
    // Predicated region
    $region10: #{tpu_custom_call.1} parent=1 // pred_check
      _
    $region11: #{tpu_custom_call.1} parent=1 // pred_check_branch
      %22 = sbr.rel (0) target = $region13
    $region12: #{tpu_custom_call.1} parent=1 // pred_region
      %23 = dma.done [#allocation3], 256
    $region13: #{tpu_custom_call.1} parent=1 // pred_fallthru
      _
    %v24 = vld [vmem:[%s1] sm:$0x3]
    %v25 = vmul.f32 %v24, -0.2
    %v26 = vmul.f32 %v25, 1.442695
    %v27 = vpow.pop %v26
    %v28 = vsub.f32 1.0, %v27
    %v29 = vld [vmem:[#allocation2] sm:$0xff]
    %v30 = vld [vmem:[#allocation2 + $0x8] sm:$0xff]
    %v32 = vlaneseq
    %v33 = vshrl.u32 %v32, 7
    %v34 = vsub.s32 0, %v33
    %v35 = vrot.slane %v28, %v34
    %v36 = vlaneseq
    %v37 = vshrl.u32 %v36, 7
    %v38 = vsub.s32 1, %v37
    %v39 = vrot.slane %v28, %v38
    %v42 = vmul.f32 %v29, %v35
    %v43 = vmul.f32 %v30, %v39
    %44 = vst [vmem:[#allocation5] sm:$0xff] %v42
    %45 = vst [vmem:[#allocation5 + $0x8] sm:$0xff] %v43
    // Predicated region
    $region14: #{tpu_custom_call.1} parent=1 // pred_check
      _
    $region15: #{tpu_custom_call.1} parent=1 // pred_check_branch
      %47 = sbr.rel (0) target = $region17
    $region16: #{tpu_custom_call.1} parent=1 // pred_region
      %s49 = ssub.s32 256, 256
      %50 = vsyncadd [#allocation4], %s49
      %s52 = sshll.u32 [#allocation5], 4
      %s53 = int_to_ptr.vmem [resolvable:$true] %s52
      %55 = dma.vmem_to_hbm [thread:$0]  %s53, 256, %s2, [#allocation4]
    $region17: #{tpu_custom_call.1} parent=1 // pred_fallthru
      _
    // Predicated region
    $region18: #{tpu_custom_call.1} parent=1 // pred_check
      _
    $region19: #{tpu_custom_call.1} parent=1 // pred_check_branch
      %57 = sbr.rel (0) target = $region21
    $region20: #{tpu_custom_call.1} parent=1 // pred_region
      %58 = dma.done [#allocation4], 256
    $region21: #{tpu_custom_call.1} parent=1 // pred_fallthru
      _
    %59 = vsyncpa [#allocation3], 1
    %60 = vsyncpa [#allocation4], 1

</llo_original>
